<compile_context>
chip_gen: v6e
topology: v6e:2x2x1
jax: 0.10.0
libtpu: 0.0.40
codegen_flags: <defaults>
</compile_context>

<pallas_src>
import functools

import jax
import jax.numpy as jnp
from jax.experimental import pallas as pl
from jax.experimental.pallas import tpu as pltpu


def _moe_shell_kernel(x_ref, wg_ref, we_ref, out_ref, *, num_experts, d_out, k):
    """Fused MoEShell forward for one stacked token batch.

    x_ref  : (T, D_IN)        f32   stacked task inputs
    wg_ref : (D_IN, E)        f32   LAST task's gating weights (pre-transposed)
    we_ref : (D_IN, E*D_OUT)  bf16  expert weights, lane-dense:
                                    we_ref[i, e*D_OUT + o] == We[e][o, i]
    out_ref: (T, D_OUT)       f32
    """
    t = x_ref.shape[0]
    ed = num_experts * d_out

    # ---------------- Gating (f32, matches the reference) --------------------
    # Reference reuses the LAST task's logits for every task's selection.
    x_last = x_ref[t - 1:t, :]                                    # (1, D_IN)
    logits = jnp.dot(x_last, wg_ref[...],
                     preferred_element_type=jnp.float32)          # (1, E)

    # top-k mask via (k-1) rounds of knock-out max.  Exact for distinct logits;
    # exact ties keep all tied entries (torch.topk would break ties by index).
    work = logits
    thresh = jnp.max(work, axis=-1, keepdims=True)                # (1, 1)
    for _ in range(k - 1):                                        # k is tiny & static
        work = jnp.where(work >= thresh, -jnp.inf, work)
        thresh = jnp.max(work, axis=-1, keepdims=True)
    mask = (logits >= thresh).astype(jnp.float32)                 # (1, E)
    masked = mask * logits
    sel = masked / (jnp.sum(masked, axis=-1, keepdims=True) + 1e-9)  # (1, E)

    # ---------------- Experts: one lane-dense MXU push -----------------------
    # Unselected experts carry sel == 0 exactly, so the dense sum over experts
    # equals the sparse reference.
    y = jnp.dot(x_ref[...].astype(jnp.bfloat16), we_ref[...],
                preferred_element_type=jnp.float32)               # (T, E*D_OUT)

    # -------- Gate-weighted combine, entirely on the MXU (no lane slices) ----
    # expand[e, c] = 1  iff  e*d_out <= c < (e+1)*d_out    (kron(I_E, 1_{d_out}))
    e_idx = jax.lax.broadcasted_iota(jnp.int32, (num_experts, ed), 0)
    c_idx = jax.lax.broadcasted_iota(jnp.int32, (num_experts, ed), 1)
    lo = e_idx * d_out
    expand = ((c_idx >= lo) & (c_idx < lo + d_out)).astype(jnp.float32)
    sel_wide = jnp.dot(sel, expand,
                       preferred_element_type=jnp.float32)        # (1, E*D_OUT)

    # fold[c, o] = 1  iff  c == e*d_out + o for some e      (stacked identities)
    c2 = jax.lax.broadcasted_iota(jnp.int32, (ed, d_out), 0)
    o2 = jax.lax.broadcasted_iota(jnp.int32, (ed, d_out), 1)
    fold_b = c2 == o2
    for e in range(1, num_experts):  # TODO(synk): lax.fori_loop if E grows large
        fold_b = fold_b | (c2 == o2 + e * d_out)
    fold = fold_b.astype(jnp.float32)                             # (E*D_OUT, D_OUT)

    # out[t, o] = sum_e sel[e] * y[t, e*d_out + o]   (kept in f32 on the MXU)
    out_ref[...] = jnp.dot(y * sel_wide, fold,
                           preferred_element_type=jnp.float32)


def prepare_moe_params(wg, we):
    """One-time (init-time) parameter prep — call once, reuse every forward.

    wg: (num_tasks, E, D_IN) f32 gating Linear weights (PyTorch layout).
    we: (E, D_OUT, D_IN)     f32 expert Linear weights (PyTorch layout).

    Returns (wg_last_t, we_t, num_tasks):
      wg_last_t: (D_IN, E)       f32   only the last task's gating row is live.
      we_t:      (D_IN, E*D_OUT) bf16  lane-dense persisted expert weights.
    """
    num_tasks = wg.shape[0]
    num_experts, d_out, d_in = we.shape
    wg_last_t = jnp.asarray(wg[-1].T, jnp.float32)                       # (D_IN, E)
    we_t = jnp.transpose(we, (2, 0, 1)).reshape(d_in, num_experts * d_out)
    we_t = we_t.astype(jnp.bfloat16)                                     # persisted bf16
    return wg_last_t, we_t, num_tasks


@functools.partial(jax.jit, static_argnums=(3,))
def moe_shell_forward_stacked(x, wg_last_t, we_t, k):
    """x: (T, D_IN) f32 stacked task inputs -> (T, D_OUT) f32 stacked outputs."""
    t, d_in = x.shape
    num_experts = wg_last_t.shape[1]
    ed = we_t.shape[1]
    d_out = ed // num_experts
    k = min(int(k), num_experts)

    kernel = functools.partial(
        _moe_shell_kernel, num_experts=num_experts, d_out=d_out, k=k)
    vmem = pl.BlockSpec(memory_space=pltpu.MemorySpace.VMEM)

    flops = (2 * t * d_in * ed          # expert matmul
             + 2 * t * ed * d_out       # fold matmul
             + 2 * d_in * num_experts   # gating row
             + 2 * num_experts * ed)    # sel expansion
    bytes_accessed = (x.size * 4 + wg_last_t.size * 4 + we_t.size * 2
                      + t * d_out * 4)

    # NOTE: gridless single invocation on purpose — at T=2, D_OUT=32 there is
    # no (8,128)-aligned split worth a grid.  See header notes for production
    # tiling (parallel grid axes, 128/256-multiple tiles, v7x VMEM budget).
    return pl.pallas_call(
        kernel,
        out_shape=jax.ShapeDtypeStruct((t, d_out), jnp.float32),
        in_specs=[vmem, vmem, vmem],
        out_specs=vmem,
        cost_estimate=pl.CostEstimate(flops=flops, transcendentals=0,
                                      bytes_accessed=bytes_accessed),
    )(x, wg_last_t, we_t)


def moe_shell_forward(x_list, wg_last_t, we_t, num_tasks, k):
    """Module-parity wrapper: list[(D_IN,)] in -> list[(D_OUT,)] out.

    Production consumers should call moe_shell_forward_stacked directly and
    keep the stacked (T, D_OUT) array (the per-task list slices are pure
    wrapper convenience).
    """
    assert len(x_list) == num_tasks, "moe block takes a list of length num_tasks"
    # TODO(synk): noisy_gating (torch.normal noise) uses the module default 0.0,
    # so no noise is added.
    # TODO(synk): Python-side `self.is_active` / `active_experts` bookkeeping has
    # no effect on the returned tensors and is omitted.
    # TODO(synk): the reference's `e_outputs[e_idx]` int-key lookup is a bug
    # (dict keys are strings); the intended gate-weighted expert sum is
    # implemented instead.
    x = jnp.stack(x_list, axis=0)                                  # (T, D_IN) f32
    out = moe_shell_forward_stacked(x, wg_last_t, we_t, k)         # (T, D_OUT)
    return [out[i] for i in range(num_tasks)]


if __name__ == "__main__":
    NUM_TASKS, NUM_EXPERTS, D_IN, D_OUT, K = 2, 4, 32, 32, 2

    key = jax.random.PRNGKey(0)
    k_wg, k_we, k_x = jax.random.split(key, 3)
    wg = jax.random.normal(k_wg, (NUM_TASKS, NUM_EXPERTS, D_IN), jnp.float32) / jnp.sqrt(D_IN)
    we = jax.random.normal(k_we, (NUM_EXPERTS, D_OUT, D_IN), jnp.float32) / jnp.sqrt(D_IN)
    x_list = [jax.random.normal(jax.random.fold_in(k_x, t), (D_IN,), jnp.float32)
              for t in range(NUM_TASKS)]

    # Init-time prep (transpose + bf16 cast happen exactly once).
    wg_last_t, we_t, num_tasks = prepare_moe_params(wg, we)

    outs = moe_shell_forward(x_list, wg_last_t, we_t, num_tasks, K)
    outs = [jax.block_until_ready(o) for o in outs]

    # Pure-JAX f32 reference (kernel uses bf16 expert-matmul inputs with f32
    # accumulation, hence the slightly loosened tolerance).
    x = jnp.stack(x_list, axis=0)
    logits = jnp.einsum('td,ted->te', x, wg)
    last = logits[-1]
    _, idx = jax.lax.top_k(last, K)
    mask = jnp.zeros_like(last).at[idx].set(1.0)
    masked = mask * last
    sel_row = masked / (masked.sum() + 1e-9)
    y = jnp.einsum('td,eod->teo', x, we)
    out_ref = jnp.einsum('e,teo->to', sel_row, y)
    for t_ in range(NUM_TASKS):
        assert outs[t_].shape == (D_OUT,)
        assert jnp.allclose(outs[t_], out_ref[t_], rtol=2e-2, atol=2e-2), f"mismatch task {t_}"

    print("KERNEL_OK")
</pallas_src>

<mosaic_0001>
module attributes {stable_mosaic.version = 11 : i64} {
  func.func @_moe_shell_kernel(%arg0: memref<2x32xf32, #tpu.memory_space<vmem>>, %arg1: memref<32x4xf32, #tpu.memory_space<vmem>>, %arg2: memref<32x128xbf16, #tpu.memory_space<vmem>>, %arg3: memref<2x32xf32, #tpu.memory_space<vmem>>) attributes {dimension_semantics = [], scalar_prefetch = 0 : i64, scratch_operands = 0 : i64, tpu.core_type = #tpu.core_type<tc>} {
    %c1 = arith.constant 1 : index
    %c0 = arith.constant 0 : index
    %0 = vector.load %arg0[%c1, %c0] : memref<2x32xf32, #tpu.memory_space<vmem>>, vector<1x32xf32>
    %c0_0 = arith.constant 0 : index
    %c0_1 = arith.constant 0 : index
    %1 = vector.load %arg1[%c0_0, %c0_1] : memref<32x4xf32, #tpu.memory_space<vmem>>, vector<32x4xf32>
    %cst = arith.constant dense<0.000000e+00> : vector<1x4xf32>
    %2 = tpu.matmul %0, %1, %cst {dimension_numbers = #tpu.dot_dimension_numbers<[1], [0], [0], [1], [0, 0, 1, 1], [], []>} : vector<1x32xf32>, vector<32x4xf32>, vector<1x4xf32> -> vector<1x4xf32>
    %cst_2 = arith.constant dense<0xFF800000> : vector<1xf32>
    %3 = vector.multi_reduction <maximumf>, %2, %cst_2 [1] : vector<1x4xf32> to vector<1xf32>
    %4 = vector.shape_cast %3 : vector<1xf32> to vector<1x1xf32>
    %5 = vector.broadcast %4 : vector<1x1xf32> to vector<1x4xf32>
    %6 = arith.cmpf oge, %2, %5 : vector<1x4xf32>
    %cst_3 = arith.constant 0xFF800000 : f32
    %7 = vector.broadcast %cst_3 : f32 to vector<1x4xf32>
    %8 = arith.select %6, %7, %2 : vector<1x4xi1>, vector<1x4xf32>
    %cst_4 = arith.constant dense<0xFF800000> : vector<1xf32>
    %9 = vector.multi_reduction <maximumf>, %8, %cst_4 [1] : vector<1x4xf32> to vector<1xf32>
    %10 = vector.shape_cast %9 : vector<1xf32> to vector<1x1xf32>
    %11 = vector.broadcast %10 : vector<1x1xf32> to vector<1x4xf32>
    %12 = arith.cmpf oge, %2, %11 : vector<1x4xf32>
    %13 = arith.extui %12 : vector<1x4xi1> to vector<1x4xi32>
    %14 = arith.sitofp %13 : vector<1x4xi32> to vector<1x4xf32>
    %15 = arith.mulf %14, %2 : vector<1x4xf32>
    %cst_5 = arith.constant dense<0.000000e+00> : vector<1xf32>
    %16 = vector.multi_reduction <add>, %15, %cst_5 [1] : vector<1x4xf32> to vector<1xf32>
    %17 = vector.shape_cast %16 : vector<1xf32> to vector<1x1xf32>
    %cst_6 = arith.constant 9.99999971E-10 : f32
    %18 = vector.broadcast %cst_6 : f32 to vector<1x1xf32>
    %19 = arith.addf %17, %18 : vector<1x1xf32>
    %20 = vector.broadcast %19 : vector<1x1xf32> to vector<1x4xf32>
    %21 = arith.divf %15, %20 : vector<1x4xf32>
    %c0_7 = arith.constant 0 : index
    %c0_8 = arith.constant 0 : index
    %22 = vector.load %arg0[%c0_7, %c0_8] : memref<2x32xf32, #tpu.memory_space<vmem>>, vector<2x32xf32>
    %23 = arith.truncf %22 : vector<2x32xf32> to vector<2x32xbf16>
    %c0_9 = arith.constant 0 : index
    %c0_10 = arith.constant 0 : index
    %24 = vector.load %arg2[%c0_9, %c0_10] : memref<32x128xbf16, #tpu.memory_space<vmem>>, vector<32x128xbf16>
    %cst_11 = arith.constant dense<0.000000e+00> : vector<2x128xf32>
    %25 = tpu.matmul %23, %24, %cst_11 {dimension_numbers = #tpu.dot_dimension_numbers<[1], [0], [0], [1], [0, 0, 1, 1], [], []>} : vector<2x32xbf16>, vector<32x128xbf16>, vector<2x128xf32> -> vector<2x128xf32>
    %26 = tpu.iota {dimensions = array<i32: 0>} : vector<4x128xi32>
    %27 = tpu.iota {dimensions = array<i32: 1>} : vector<4x128xi32>
    %c32_i32 = arith.constant 32 : i32
    %28 = vector.broadcast %c32_i32 : i32 to vector<4x128xi32>
    %29 = arith.muli %26, %28 : vector<4x128xi32>
    %30 = arith.cmpi sge, %27, %29 : vector<4x128xi32>
    %c32_i32_12 = arith.constant 32 : i32
    %31 = vector.broadcast %c32_i32_12 : i32 to vector<4x128xi32>
    %32 = arith.addi %29, %31 : vector<4x128xi32>
    %33 = arith.cmpi slt, %27, %32 : vector<4x128xi32>
    %34 = arith.andi %30, %33 : vector<4x128xi1>
    %35 = arith.extui %34 : vector<4x128xi1> to vector<4x128xi32>
    %36 = arith.sitofp %35 : vector<4x128xi32> to vector<4x128xf32>
    %cst_13 = arith.constant dense<0.000000e+00> : vector<1x128xf32>
    %37 = tpu.matmul %21, %36, %cst_13 {dimension_numbers = #tpu.dot_dimension_numbers<[1], [0], [0], [1], [0, 0, 1, 1], [], []>} : vector<1x4xf32>, vector<4x128xf32>, vector<1x128xf32> -> vector<1x128xf32>
    %38 = tpu.iota {dimensions = array<i32: 0>} : vector<128x32xi32>
    %39 = tpu.iota {dimensions = array<i32: 1>} : vector<128x32xi32>
    %40 = arith.cmpi eq, %38, %39 : vector<128x32xi32>
    %c32_i32_14 = arith.constant 32 : i32
    %41 = vector.broadcast %c32_i32_14 : i32 to vector<128x32xi32>
    %42 = arith.addi %39, %41 : vector<128x32xi32>
    %43 = arith.cmpi eq, %38, %42 : vector<128x32xi32>
    %44 = arith.ori %40, %43 : vector<128x32xi1>
    %c64_i32 = arith.constant 64 : i32
    %45 = vector.broadcast %c64_i32 : i32 to vector<128x32xi32>
    %46 = arith.addi %39, %45 : vector<128x32xi32>
    %47 = arith.cmpi eq, %38, %46 : vector<128x32xi32>
    %48 = arith.ori %44, %47 : vector<128x32xi1>
    %c96_i32 = arith.constant 96 : i32
    %49 = vector.broadcast %c96_i32 : i32 to vector<128x32xi32>
    %50 = arith.addi %39, %49 : vector<128x32xi32>
    %51 = arith.cmpi eq, %38, %50 : vector<128x32xi32>
    %52 = arith.ori %48, %51 : vector<128x32xi1>
    %53 = arith.extui %52 : vector<128x32xi1> to vector<128x32xi32>
    %54 = arith.sitofp %53 : vector<128x32xi32> to vector<128x32xf32>
    %55 = vector.broadcast %37 : vector<1x128xf32> to vector<2x128xf32>
    %56 = arith.mulf %25, %55 : vector<2x128xf32>
    %cst_15 = arith.constant dense<0.000000e+00> : vector<2x32xf32>
    %57 = tpu.matmul %56, %54, %cst_15 {dimension_numbers = #tpu.dot_dimension_numbers<[1], [0], [0], [1], [0, 0, 1, 1], [], []>} : vector<2x128xf32>, vector<128x32xf32>, vector<2x32xf32> -> vector<2x32xf32>
    %c0_16 = arith.constant 0 : index
    %c0_17 = arith.constant 0 : index
    %58 = vector.load %arg3[%c0_16, %c0_17] : memref<2x32xf32, #tpu.memory_space<vmem>>, vector<2x32xf32>
    tpu.vector_store %arg3[%c0_16, %c0_17], %57 {strides = array<i32>} : memref<2x32xf32, #tpu.memory_space<vmem>>, vector<2x32xf32>,
    return
  }
}

</mosaic_0001>

<llo_original>
// kernel: moe_shell_forward_stacked.1
$region0: #{moe_shell_forward_stacked.1}
  #allocation0 [shape = 'u32[]', space=smem, size = 0x4, offset = 0x4, fixed_abs, tag = 'smem constant byte address 0x4 - core index']
  #allocation1 [shape = 'u32[144,128]{1,0:T(1,128)}', space=vmem, size = 0x12000, scoped, tag = 'internal scratch']
  %s0 = inlined_call_operand.vmem [shape: f32[2,32], index: 0, kind: input, shape index: {}]
  %s1 = inlined_call_operand.vmem [shape: f32[32,4], index: 1, kind: input, shape index: {}]
  %s2 = inlined_call_operand.vmem [shape: bf16[32,128], index: 2, kind: input, shape index: {}]
  %s3 = inlined_call_operand.hbm [shape: f32[2,32], index: 3, kind: output, shape index: {}]
  %s4 = sld [smem:[#allocation0]]
  $region22: #{moe_shell_forward_stacked.1} parent=0
    _
  %s6 = ssub.s32 1, %s4
  %s7 = scalar_select 0, %s6, %s4
  $region1: #{moe_shell_forward_stacked.1} parent=0
    #allocation2 [shape = 'u8[1024]{0}', space=vmem, size = 0x400, scoped, tag = 'output window, operand 0, single buffered']
    #allocation3 [shape = 's32[1]{0}', space=sflag, size = 0x4, scoped, tag = 'scoped memory for moe_shell_forward_stacked.1']
    %8 = vsyncpa [#allocation3], 0
    // Predicated region
    $region2: #{moe_shell_forward_stacked.1} parent=1 // pred_check
      _
    $region3: #{moe_shell_forward_stacked.1} parent=1 // pred_check_branch
      %10 = sbr.rel (0) target = $region5
    $region4: #{moe_shell_forward_stacked.1} parent=1 // pred_region
      _
    $region5: #{moe_shell_forward_stacked.1} parent=1 // pred_fallthru
      _
    // Predicated region
    $region6: #{moe_shell_forward_stacked.1} parent=1 // pred_check
      _
    $region7: #{moe_shell_forward_stacked.1} parent=1 // pred_check_branch
      %12 = sbr.rel (0) target = $region9
    $region8: #{moe_shell_forward_stacked.1} parent=1 // pred_region
      _
    $region9: #{moe_shell_forward_stacked.1} parent=1 // pred_fallthru
      _
    // Predicated region
    $region10: #{moe_shell_forward_stacked.1} parent=1 // pred_check
      _
    $region11: #{moe_shell_forward_stacked.1} parent=1 // pred_check_branch
      %14 = sbr.rel (0) target = $region13
    $region12: #{moe_shell_forward_stacked.1} parent=1 // pred_region
      _
    $region13: #{moe_shell_forward_stacked.1} parent=1 // pred_fallthru
      _
    %v16 = vld [vmem:[%s0 + $0x1] sm:$0x1]
    %v17 = vld [vmem:[%s1] sm:$0xff]
    %v18 = vld [vmem:[%s1 + $0x8] sm:$0xff]
    %v19 = vld [vmem:[%s1 + $0x10] sm:$0xff]
    %v20 = vld [vmem:[%s1 + $0x18] sm:$0xff]
    %vm21 = vcmask 261120
    %v23 = vsel %vm21, %v16, 0
    %25 = vmatprep.subr.mxu0 0.0
    %26 = vmatpush1.msra.mxu0 0.0
    %27 = vmatprep.subr.mxu0 0.0
    %28 = vmatpush1.msra.mxu0 0.0
    %29 = vmatprep.subr.mxu0 0.0
    %30 = vmatpush1.msra.mxu0 0.0
    %31 = vmatprep.subr.mxu0 0.0
    %32 = vmatpush1.msra.mxu0 0.0
    %33 = vmatprep.subr.mxu0 0.0
    %34 = vmatpush1.msra.mxu0 0.0
    %35 = vmatprep.subr.mxu0 0.0
    %36 = vmatpush1.msra.mxu0 0.0
    %37 = vmatprep.subr.mxu0 0.0
    %38 = vmatpush1.msra.mxu0 0.0
    %39 = vmatprep.subr.mxu0 0.0
    %40 = vmatpush1.msra.mxu0 0.0
    %41 = vmatprep.subr.mxu0 0.0
    %42 = vmatpush1.msra.mxu0 0.0
    %43 = vmatprep.subr.mxu0 0.0
    %44 = vmatpush1.msra.mxu0 0.0
    %45 = vmatprep.subr.mxu0 0.0
    %46 = vmatpush1.msra.mxu0 0.0
    %47 = vmatprep.subr.mxu0 0.0
    %48 = vmatpush1.msra.mxu0 0.0
    %49 = vmatprep.subr.mxu0 0.0
    %50 = vmatpush1.msra.mxu0 %v20
    %51 = vmatprep.subr.mxu0 0.0
    %52 = vmatpush1.msra.mxu0 %v19
    %53 = vmatprep.subr.mxu0 0.0
    %54 = vmatpush1.msra.mxu0 %v18
    %55 = vmatprep.subr.mxu0 0.0
    %56 = vmatpush1.msra.mxu0 %v17
    %57 = vmatprep.subr.mxu0 0.0
    %58 = vmatpush2.msra.mxu0 0.0
    %59 = vmatprep.subr.mxu0 0.0
    %60 = vmatpush2.msra.mxu0 0.0
    %61 = vmatprep.subr.mxu0 0.0
    %62 = vmatpush2.msra.mxu0 0.0
    %63 = vmatprep.subr.mxu0 0.0
    %64 = vmatpush2.msra.mxu0 0.0
    %65 = vmatprep.subr.mxu0 0.0
    %66 = vmatpush2.msra.mxu0 0.0
    %67 = vmatprep.subr.mxu0 0.0
    %68 = vmatpush2.msra.mxu0 0.0
    %69 = vmatprep.subr.mxu0 0.0
    %70 = vmatpush2.msra.mxu0 0.0
    %71 = vmatprep.subr.mxu0 0.0
    %72 = vmatpush2.msra.mxu0 0.0
    %73 = vmatprep.subr.mxu0 0.0
    %74 = vmatpush2.msra.mxu0 0.0
    %75 = vmatprep.subr.mxu0 0.0
    %76 = vmatpush2.msra.mxu0 0.0
    %77 = vmatprep.subr.mxu0 0.0
    %78 = vmatpush2.msra.mxu0 0.0
    %79 = vmatprep.subr.mxu0 0.0
    %80 = vmatpush2.msra.mxu0 0.0
    %81 = vmatprep.subr.mxu0 0.0
    %82 = vmatpush2.msra.mxu0 0.0
    %83 = vmatprep.subr.mxu0 0.0
    %84 = vmatpush2.msra.mxu0 0.0
    %85 = vmatprep.subr.mxu0 0.0
    %86 = vmatpush2.msra.mxu0 0.0
    %87 = vmatprep.subr.mxu0 0.0
    %88 = vmatpush2.msra.mxu0 0.0
    %89 = vmatprep.mubr.f32.mxu0 0.0
    %90 = vmatmul.mubr.f32.gmra.mxu0 %v23
    %v91 = vpop.f32.mrf.mxu0
    %v92 = vadd.f32 0.0, %v91
    %v93 = vpop.f32.mrf.mxu0
    %94 = vdwg.mxu0
    %vm95 = vcmask 24576
    %v96 = vsel %vm95, %v92, -inf
    %97 = vmax.xlane.f32.xlu0 %v96
    %v98 = vpop.xlane.xlu0 %97
    %vm99 = vcmp.ge.f32.partialorder %v92, %v98
    %v100 = vsel %vm99, -inf, %v92
    %v101 = vsel %vm95, %v100, -inf
    %102 = vmax.xlane.f32.xlu0 %v101
    %v103 = vpop.xlane.xlu0 %102
    %vm104 = vcmp.ge.f32.partialorder %v92, %v103
    %v105 = vsel %vm104, 1, 0
    %v106 = vcvt.s32.f32 %v105
    %v107 = vmul.f32 %v106, %v92
    %v108 = vsel %vm95, %v107, 0.0
    %109 = vadd.xlane.f32.xlu0 %v108
    %v110 = vpop.xlane.xlu0 %109
    %v111 = vadd.f32 %v110, 1e-09
    %v112 = vrcp.pop %v111
    %v113 = vmul.f32 %v107, %v112
    %v114 = vld [vmem:[%s0] sm:$0x3]
    %v115 = vpack.c.bf16 %v114, %v114
    %v116 = vld [vmem:[%s2] sm:$0xf]
    %v117 = vld [vmem:[%s2 + $0x4] sm:$0xf]
    %v118 = vld [vmem:[%s2 + $0x8] sm:$0xf]
    %v119 = vld [vmem:[%s2 + $0xc] sm:$0xf]
    %v124 = vunpack.c.l.b16 %v116
    %v125 = vunpack.c.l.b16 %v117
    %v126 = vunpack.c.l.b16 %v118
    %v127 = vunpack.c.l.b16 %v119
    %v128 = vpack.c.b16 %v125, %v124
    %v129 = vpack.c.b16 %v127, %v126
    %v133 = vsel %vm21, %v115, 0
    %135 = vmatprep.subr.bf16.mxu0 0
    %136 = vmatpush1.bf16.msra.mxu0 0
    %137 = vmatprep.subr.bf16.mxu0 0
    %138 = vmatpush1.bf16.msra.mxu0 0
    %139 = vmatprep.subr.bf16.mxu0 0
    %140 = vmatpush1.bf16.msra.mxu0 0
    %141 = vmatprep.subr.bf16.mxu0 0
    %142 = vmatpush1.bf16.msra.mxu0 0
    %143 = vmatprep.subr.bf16.mxu0 0
    %144 = vmatpush1.bf16.msra.mxu0 0
    %145 = vmatprep.subr.bf16.mxu0 0
    %146 = vmatpush1.bf16.msra.mxu0 0
    %147 = vmatprep.subr.bf16.mxu0 0
    %148 = vmatpush1.bf16.msra.mxu0 %v129
    %149 = vmatprep.subr.bf16.mxu0 0
    %150 = vmatpush1.bf16.msra.mxu0 %v128
    %151 = vmatprep.subr.bf16.mxu0 0
    %152 = vmatpush2.bf16.msra.mxu0 0
    %153 = vmatprep.subr.bf16.mxu0 0
    %154 = vmatpush2.bf16.msra.mxu0 0
    %155 = vmatprep.subr.bf16.mxu0 0
    %156 = vmatpush2.bf16.msra.mxu0 0
    %157 = vmatprep.subr.bf16.mxu0 0
    %158 = vmatpush2.bf16.msra.mxu0 0
    %159 = vmatprep.subr.bf16.mxu0 0
    %160 = vmatpush2.bf16.msra.mxu0 0
    %161 = vmatprep.subr.bf16.mxu0 0
    %162 = vmatpush2.bf16.msra.mxu0 0
    %163 = vmatprep.subr.bf16.mxu0 0
    %164 = vmatpush2.bf16.msra.mxu0 0
    %165 = vmatprep.subr.bf16.mxu0 0
    %166 = vmatpush2.bf16.msra.mxu0 0
    %167 = vmatprep.mubr.bf16.mxu0 0
    %168 = vmatmul.mubr.bf16.gmra.mxu0 %v133
    %v169 = vpop.f32.mrf.mxu0
    %v170 = vadd.f32 0.0, %v169
    %v171 = vpop.f32.mrf.mxu0
    %v172 = vpop.f32.mrf.mxu0
    %v173 = vpop.f32.mrf.mxu0
    %174 = vdwg.mxu0
    %v175 = vlaneseq
    %v176 = vshrl.u32 %v175, 7
    %v177 = vlaneseq
    %v178 = vand.u32 %v177, 127
    %v179 = vmul.u32 %v176, 32
    %vm180 = vcmp.ge.s32.totalorder %v178, %v179
    %v181 = vadd.s32 %v179, 32
    %vm182 = vcmp.lt.s32.totalorder %v178, %v181
    %vm183 = vmand %vm180, %vm182
    %v184 = vsel %vm183, 1, 0
    %v185 = vcvt.s32.f32 %v184
    %vm186 = vcmask 31744
    %v188 = vsel %vm186, %v113, 0
    %vm190 = vcmask 1043456
    %v192 = vsel %vm190, %v185, 0
    %194 = vmatprep.subr.mxu0 0.0
    %195 = vmatpush1.msra.mxu0 0.0
    %196 = vmatprep.subr.mxu0 0.0
    %197 = vmatpush1.msra.mxu0 0.0
    %198 = vmatprep.subr.mxu0 0.0
    %199 = vmatpush1.msra.mxu0 0.0
    %200 = vmatprep.subr.mxu0 0.0
    %201 = vmatpush1.msra.mxu0 0.0
    %202 = vmatprep.subr.mxu0 0.0
    %203 = vmatpush1.msra.mxu0 0.0
    %204 = vmatprep.subr.mxu0 0.0
    %205 = vmatpush1.msra.mxu0 0.0
    %206 = vmatprep.subr.mxu0 0.0
    %207 = vmatpush1.msra.mxu0 0.0
    %208 = vmatprep.subr.mxu0 0.0
    %209 = vmatpush1.msra.mxu0 0.0
    %210 = vmatprep.subr.mxu0 0.0
    %211 = vmatpush1.msra.mxu0 0.0
    %212 = vmatprep.subr.mxu0 0.0
    %213 = vmatpush1.msra.mxu0 0.0
    %214 = vmatprep.subr.mxu0 0.0
    %215 = vmatpush1.msra.mxu0 0.0
    %216 = vmatprep.subr.mxu0 0.0
    %217 = vmatpush1.msra.mxu0 0.0
    %218 = vmatprep.subr.mxu0 0.0
    %219 = vmatpush1.msra.mxu0 0.0
    %220 = vmatprep.subr.mxu0 0.0
    %221 = vmatpush1.msra.mxu0 0.0
    %222 = vmatprep.subr.mxu0 0.0
    %223 = vmatpush1.msra.mxu0 0.0
    %224 = vmatprep.subr.mxu0 0.0
    %225 = vmatpush1.msra.mxu0 %v192
    %226 = vmatprep.subr.mxu0 0.0
    %227 = vmatpush2.msra.mxu0 0.0
    %228 = vmatprep.subr.mxu0 0.0
    %229 = vmatpush2.msra.mxu0 0.0
    %230 = vmatprep.subr.mxu0 0.0
    %231 = vmatpush2.msra.mxu0 0.0
    %232 = vmatprep.subr.mxu0 0.0
    %233 = vmatpush2.msra.mxu0 0.0
    %234 = vmatprep.subr.mxu0 0.0
    %235 = vmatpush2.msra.mxu0 0.0
    %236 = vmatprep.subr.mxu0 0.0
    %237 = vmatpush2.msra.mxu0 0.0
    %238 = vmatprep.subr.mxu0 0.0
    %239 = vmatpush2.msra.mxu0 0.0
    %240 = vmatprep.subr.mxu0 0.0
    %241 = vmatpush2.msra.mxu0 0.0
    %242 = vmatprep.subr.mxu0 0.0
    %243 = vmatpush2.msra.mxu0 0.0
    %244 = vmatprep.subr.mxu0 0.0
    %245 = vmatpush2.msra.mxu0 0.0
    %246 = vmatprep.subr.mxu0 0.0
    %247 = vmatpush2.msra.mxu0 0.0
    %248 = vmatprep.subr.mxu0 0.0
    %249 = vmatpush2.msra.mxu0 0.0
    %250 = vmatprep.subr.mxu0 0.0
    %251 = vmatpush2.msra.mxu0 0.0
    %252 = vmatprep.subr.mxu0 0.0
    %253 = vmatpush2.msra.mxu0 0.0
    %254 = vmatprep.subr.mxu0 0.0
    %255 = vmatpush2.msra.mxu0 0.0
    %256 = vmatprep.subr.mxu0 0.0
    %257 = vmatpush2.msra.mxu0 0.0
    %258 = vmatprep.mubr.f32.mxu0 0.0
    %259 = vmatmul.mubr.f32.gmra.mxu0 %v188
    %v260 = vpop.f32.mrf.mxu0
    %v261 = vadd.f32 0.0, %v260
    %v262 = vpop.f32.mrf.mxu0
    %263 = vdwg.mxu0
    %v264 = vadd.s32 %v176, 8
    %v265 = vadd.s32 %v176, 16
    %v266 = vadd.s32 %v176, 24
    %v267 = vadd.s32 %v176, 32
    %v268 = vadd.s32 %v176, 40
    %v269 = vadd.s32 %v176, 48
    %v270 = vadd.s32 %v176, 56
    %v271 = vadd.s32 %v176, 64
    %v272 = vadd.s32 %v176, 72
    %v273 = vadd.s32 %v176, 80
    %v274 = vadd.s32 %v176, 88
    %v275 = vadd.s32 %v176, 96
    %v276 = vadd.s32 %v176, 104
    %v277 = vadd.s32 %v176, 112
    %v278 = vadd.s32 %v176, 120
    %vm279 = vcmp.eq.s32.totalorder %v176, %v178
    %vm280 = vcmp.eq.s32.totalorder %v264, %v178
    %vm281 = vcmp.eq.s32.totalorder %v265, %v178
    %vm282 = vcmp.eq.s32.totalorder %v266, %v178
    %vm283 = vcmp.eq.s32.totalorder %v267, %v178
    %vm284 = vcmp.eq.s32.totalorder %v268, %v178
    %vm285 = vcmp.eq.s32.totalorder %v269, %v178
    %vm286 = vcmp.eq.s32.totalorder %v270, %v178
    %vm287 = vcmp.eq.s32.totalorder %v271, %v178
    %vm288 = vcmp.eq.s32.totalorder %v272, %v178
    %vm289 = vcmp.eq.s32.totalorder %v273, %v178
    %vm290 = vcmp.eq.s32.totalorder %v274, %v178
    %vm291 = vcmp.eq.s32.totalorder %v275, %v178
    %vm292 = vcmp.eq.s32.totalorder %v276, %v178
    %vm293 = vcmp.eq.s32.totalorder %v277, %v178
    %vm294 = vcmp.eq.s32.totalorder %v278, %v178
    %v295 = vadd.s32 %v178, 32
    %vm296 = vcmp.eq.s32.totalorder %v176, %v295
    %vm297 = vcmp.eq.s32.totalorder %v264, %v295
    %vm298 = vcmp.eq.s32.totalorder %v265, %v295
    %vm299 = vcmp.eq.s32.totalorder %v266, %v295
    %vm300 = vcmp.eq.s32.totalorder %v267, %v295
    %vm301 = vcmp.eq.s32.totalorder %v268, %v295
    %vm302 = vcmp.eq.s32.totalorder %v269, %v295
    %vm303 = vcmp.eq.s32.totalorder %v270, %v295
    %vm304 = vcmp.eq.s32.totalorder %v271, %v295
    %vm305 = vcmp.eq.s32.totalorder %v272, %v295
    %vm306 = vcmp.eq.s32.totalorder %v273, %v295
    %vm307 = vcmp.eq.s32.totalorder %v274, %v295
    %vm308 = vcmp.eq.s32.totalorder %v275, %v295
    %vm309 = vcmp.eq.s32.totalorder %v276, %v295
    %vm310 = vcmp.eq.s32.totalorder %v277, %v295
    %vm311 = vcmp.eq.s32.totalorder %v278, %v295
    %vm312 = vmor %vm279, %vm296
    %vm313 = vmor %vm280, %vm297
    %vm314 = vmor %vm281, %vm298
    %vm315 = vmor %vm282, %vm299
    %vm316 = vmor %vm283, %vm300
    %vm317 = vmor %vm284, %vm301
    %vm318 = vmor %vm285, %vm302
    %vm319 = vmor %vm286, %vm303
    %vm320 = vmor %vm287, %vm304
    %vm321 = vmor %vm288, %vm305
    %vm322 = vmor %vm289, %vm306
    %vm323 = vmor %vm290, %vm307
    %vm324 = vmor %vm291, %vm308
    %vm325 = vmor %vm292, %vm309
    %vm326 = vmor %vm293, %vm310
    %vm327 = vmor %vm294, %vm311
    %v328 = vadd.s32 %v178, 64
    %vm329 = vcmp.eq.s32.totalorder %v176, %v328
    %vm330 = vcmp.eq.s32.totalorder %v264, %v328
    %vm331 = vcmp.eq.s32.totalorder %v265, %v328
    %vm332 = vcmp.eq.s32.totalorder %v266, %v328
    %vm333 = vcmp.eq.s32.totalorder %v267, %v328
    %vm334 = vcmp.eq.s32.totalorder %v268, %v328
    %vm335 = vcmp.eq.s32.totalorder %v269, %v328
    %vm336 = vcmp.eq.s32.totalorder %v270, %v328
    %vm337 = vcmp.eq.s32.totalorder %v271, %v328
    %vm338 = vcmp.eq.s32.totalorder %v272, %v328
    %vm339 = vcmp.eq.s32.totalorder %v273, %v328
    %vm340 = vcmp.eq.s32.totalorder %v274, %v328
    %vm341 = vcmp.eq.s32.totalorder %v275, %v328
    %vm342 = vcmp.eq.s32.totalorder %v276, %v328
    %vm343 = vcmp.eq.s32.totalorder %v277, %v328
    %vm344 = vcmp.eq.s32.totalorder %v278, %v328
    %vm345 = vmor %vm312, %vm329
    %vm346 = vmor %vm313, %vm330
    %vm347 = vmor %vm314, %vm331
    %vm348 = vmor %vm315, %vm332
    %vm349 = vmor %vm316, %vm333
    %vm350 = vmor %vm317, %vm334
    %vm351 = vmor %vm318, %vm335
    %vm352 = vmor %vm319, %vm336
    %vm353 = vmor %vm320, %vm337
    %vm354 = vmor %vm321, %vm338
    %vm355 = vmor %vm322, %vm339
    %vm356 = vmor %vm323, %vm340
    %vm357 = vmor %vm324, %vm341
    %vm358 = vmor %vm325, %vm342
    %vm359 = vmor %vm326, %vm343
    %vm360 = vmor %vm327, %vm344
    %v361 = vadd.s32 %v178, 96
    %vm362 = vcmp.eq.s32.totalorder %v176, %v361
    %vm363 = vcmp.eq.s32.totalorder %v264, %v361
    %vm364 = vcmp.eq.s32.totalorder %v265, %v361
    %vm365 = vcmp.eq.s32.totalorder %v266, %v361
    %vm366 = vcmp.eq.s32.totalorder %v267, %v361
    %vm367 = vcmp.eq.s32.totalorder %v268, %v361
    %vm368 = vcmp.eq.s32.totalorder %v269, %v361
    %vm369 = vcmp.eq.s32.totalorder %v270, %v361
    %vm370 = vcmp.eq.s32.totalorder %v271, %v361
    %vm371 = vcmp.eq.s32.totalorder %v272, %v361
    %vm372 = vcmp.eq.s32.totalorder %v273, %v361
    %vm373 = vcmp.eq.s32.totalorder %v274, %v361
    %vm374 = vcmp.eq.s32.totalorder %v275, %v361
    %vm375 = vcmp.eq.s32.totalorder %v276, %v361
    %vm376 = vcmp.eq.s32.totalorder %v277, %v361
    %vm377 = vcmp.eq.s32.totalorder %v278, %v361
    %vm378 = vmor %vm345, %vm362
    %vm379 = vmor %vm346, %vm363
    %vm380 = vmor %vm347, %vm364
    %vm381 = vmor %vm348, %vm365
    %vm382 = vmor %vm349, %vm366
    %vm383 = vmor %vm350, %vm367
    %vm384 = vmor %vm351, %vm368
    %vm385 = vmor %vm352, %vm369
    %vm386 = vmor %vm353, %vm370
    %vm387 = vmor %vm354, %vm371
    %vm388 = vmor %vm355, %vm372
    %vm389 = vmor %vm356, %vm373
    %vm390 = vmor %vm357, %vm374
    %vm391 = vmor %vm358, %vm375
    %vm392 = vmor %vm359, %vm376
    %vm393 = vmor %vm360, %vm377
    %v394 = vsel %vm378, 1, 0
    %v395 = vsel %vm379, 1, 0
    %v396 = vsel %vm380, 1, 0
    %v397 = vsel %vm381, 1, 0
    %v398 = vsel %vm382, 1, 0
    %v399 = vsel %vm383, 1, 0
    %v400 = vsel %vm384, 1, 0
    %v401 = vsel %vm385, 1, 0
    %v402 = vsel %vm386, 1, 0
    %v403 = vsel %vm387, 1, 0
    %v404 = vsel %vm388, 1, 0
    %v405 = vsel %vm389, 1, 0
    %v406 = vsel %vm390, 1, 0
    %v407 = vsel %vm391, 1, 0
    %v408 = vsel %vm392, 1, 0
    %v409 = vsel %vm393, 1, 0
    %v410 = vcvt.s32.f32 %v394
    %v411 = vcvt.s32.f32 %v395
    %v412 = vcvt.s32.f32 %v396
    %v413 = vcvt.s32.f32 %v397
    %v414 = vcvt.s32.f32 %v398
    %v415 = vcvt.s32.f32 %v399
    %v416 = vcvt.s32.f32 %v400
    %v417 = vcvt.s32.f32 %v401
    %v418 = vcvt.s32.f32 %v402
    %v419 = vcvt.s32.f32 %v403
    %v420 = vcvt.s32.f32 %v404
    %v421 = vcvt.s32.f32 %v405
    %v422 = vcvt.s32.f32 %v406
    %v423 = vcvt.s32.f32 %v407
    %v424 = vcvt.s32.f32 %v408
    %v425 = vcvt.s32.f32 %v409
    %v426 = vlaneseq
    %v427 = vshrl.u32 %v426, 7
    %v428 = vsub.s32 0, %v427
    %v429 = vrot.slane %v261, %v428
    %v430 = vmul.f32 %v170, %v429
    %431 = vmatprep.subr.mxu0 0.0
    %432 = vmatpush1.msra.mxu0 %v425
    %433 = vmatprep.subr.mxu0 0.0
    %434 = vmatpush1.msra.mxu0 %v424
    %435 = vmatprep.subr.mxu0 0.0
    %436 = vmatpush1.msra.mxu0 %v423
    %437 = vmatprep.subr.mxu0 0.0
    %438 = vmatpush1.msra.mxu0 %v422
    %439 = vmatprep.subr.mxu0 0.0
    %440 = vmatpush1.msra.mxu0 %v421
    %441 = vmatprep.subr.mxu0 0.0
    %442 = vmatpush1.msra.mxu0 %v420
    %443 = vmatprep.subr.mxu0 0.0
    %444 = vmatpush1.msra.mxu0 %v419
    %445 = vmatprep.subr.mxu0 0.0
    %446 = vmatpush1.msra.mxu0 %v418
    %447 = vmatprep.subr.mxu0 0.0
    %448 = vmatpush1.msra.mxu0 %v417
    %449 = vmatprep.subr.mxu0 0.0
    %450 = vmatpush1.msra.mxu0 %v416
    %451 = vmatprep.subr.mxu0 0.0
    %452 = vmatpush1.msra.mxu0 %v415
    %453 = vmatprep.subr.mxu0 0.0
    %454 = vmatpush1.msra.mxu0 %v414
    %455 = vmatprep.subr.mxu0 0.0
    %456 = vmatpush1.msra.mxu0 %v413
    %457 = vmatprep.subr.mxu0 0.0
    %458 = vmatpush1.msra.mxu0 %v412
    %459 = vmatprep.subr.mxu0 0.0
    %460 = vmatpush1.msra.mxu0 %v411
    %461 = vmatprep.subr.mxu0 0.0
    %462 = vmatpush1.msra.mxu0 %v410
    %463 = vmatprep.subr.mxu0 0.0
    %464 = vmatpush2.msra.mxu0 0.0
    %465 = vmatprep.subr.mxu0 0.0
    %466 = vmatpush2.msra.mxu0 0.0
    %467 = vmatprep.subr.mxu0 0.0
    %468 = vmatpush2.msra.mxu0 0.0
    %469 = vmatprep.subr.mxu0 0.0
    %470 = vmatpush2.msra.mxu0 0.0
    %471 = vmatprep.subr.mxu0 0.0
    %472 = vmatpush2.msra.mxu0 0.0
    %473 = vmatprep.subr.mxu0 0.0
    %474 = vmatpush2.msra.mxu0 0.0
    %475 = vmatprep.subr.mxu0 0.0
    %476 = vmatpush2.msra.mxu0 0.0
    %477 = vmatprep.subr.mxu0 0.0
    %478 = vmatpush2.msra.mxu0 0.0
    %479 = vmatprep.subr.mxu0 0.0
    %480 = vmatpush2.msra.mxu0 0.0
    %481 = vmatprep.subr.mxu0 0.0
    %482 = vmatpush2.msra.mxu0 0.0
    %483 = vmatprep.subr.mxu0 0.0
    %484 = vmatpush2.msra.mxu0 0.0
    %485 = vmatprep.subr.mxu0 0.0
    %486 = vmatpush2.msra.mxu0 0.0
    %487 = vmatprep.subr.mxu0 0.0
    %488 = vmatpush2.msra.mxu0 0.0
    %489 = vmatprep.subr.mxu0 0.0
    %490 = vmatpush2.msra.mxu0 0.0
    %491 = vmatprep.subr.mxu0 0.0
    %492 = vmatpush2.msra.mxu0 0.0
    %493 = vmatprep.subr.mxu0 0.0
    %494 = vmatpush2.msra.mxu0 0.0
    %495 = vmatprep.mubr.f32.mxu0 0.0
    %496 = vmatmul.mubr.f32.gmra.mxu0 %v430
    %v497 = vpop.f32.mrf.mxu0
    %v498 = vadd.f32 0.0, %v497
    %v499 = vpop.f32.mrf.mxu0
    %500 = vdwg.mxu0
    %vm501 = vcmask 254976
    %502 = vst.msk [vmem:[#allocation2] sm:$0x3] %vm501, %v498
    // Predicated region
    $region14: #{moe_shell_forward_stacked.1} parent=1 // pred_check
      _
    $region15: #{moe_shell_forward_stacked.1} parent=1 // pred_check_branch
      %504 = sbr.rel (0) target = $region17
    $region16: #{moe_shell_forward_stacked.1} parent=1 // pred_region
      %s506 = ssub.s32 32, 32
      %507 = vsyncadd [#allocation3], %s506
      %s509 = sshll.u32 [#allocation2], 4
      %s510 = int_to_ptr.vmem [resolvable:$true] %s509
      %512 = dma.vmem_to_hbm [thread:$0]  %s510, 32, %s3, [#allocation3]
    $region17: #{moe_shell_forward_stacked.1} parent=1 // pred_fallthru
      _
    // Predicated region
    $region18: #{moe_shell_forward_stacked.1} parent=1 // pred_check
      _
    $region19: #{moe_shell_forward_stacked.1} parent=1 // pred_check_branch
      %514 = sbr.rel (0) target = $region21
    $region20: #{moe_shell_forward_stacked.1} parent=1 // pred_region
      %515 = dma.done [#allocation3], 32
    $region21: #{moe_shell_forward_stacked.1} parent=1 // pred_fallthru
      _
    %516 = vsyncpa [#allocation3], 1

</llo_original>
